<compile_context>
chip_gen: v5e
topology: v5e:2x2
jax: 0.10.0
libtpu: 0.0.40
codegen_flags: <defaults>
</compile_context>

<pallas_src>
import math
import functools

import jax
import jax.numpy as jnp
from jax import lax
from jax.experimental import pallas as pl
from jax.experimental.pallas import tpu as pltpu


def _sinusoidal_kernel(time_ref, out_ref, *, half_dim, neg_scale):
    # time_ref: (tb, 1) f32, out_ref: (tb, 2*half_dim) out_dtype
    t = time_ref[...]                                               # (tb, 1)
    # Tiny per-step freq-table rebuild: one vreg row of iota+exp (EUP slot).
    col = lax.broadcasted_iota(jnp.int32, (1, half_dim), 1).astype(jnp.float32)
    freq = jnp.exp(col * neg_scale)                                 # (1, half_dim)
    arg = t * freq                                                  # (tb, half_dim) f32
    s = jnp.sin(arg)
    c = jnp.cos(arg)
    if half_dim % 128 == 0:
        # Both halves lane-aligned -> two unmasked dense stores.
        out_ref[:, :half_dim] = s.astype(out_ref.dtype)
        out_ref[:, half_dim:] = c.astype(out_ref.dtype)
    else:
        # Build the whole row in registers, single store (no shifted/masked
        # RMW store for the cos half at lane offset half_dim).
        row = jnp.concatenate([s, c], axis=-1)                      # (tb, dim)
        out_ref[...] = row.astype(out_ref.dtype)


def _round_up(x, m):
    return ((x + m - 1) // m) * m


@functools.partial(jax.jit, static_argnames=("dim", "out_dtype"))
def sinusoidal_position_embeddings(time, *, dim, out_dtype=jnp.float32):
    """Pallas TPU implementation of SinusoidalPositionEmbeddings.forward.

    time: [B] (any real/int dtype) -> out_dtype[B, dim].  Math is f32 inside.
    """
    assert dim % 2 == 0, "dim must be even"
    assert dim >= 4, "dim must be >= 4 (half_dim - 1 would be zero otherwise)"
    half_dim = dim // 2
    B = time.shape[0]
    neg_scale = -math.log(10000.0) / (half_dim - 1)

    out_bytes = jnp.dtype(out_dtype).itemsize
    # Sublane alignment for the output block: 8 rows (f32), 16 (bf16), 32 (1B).
    row_align = max(8, 32 // out_bytes)

    # VMEM-budget-driven batch tile.  Per row of tile we pay (double-buffered):
    #   output: 2 * dim * out_bytes
    #   time  : 2 * 128 * 4          ((tb,1) block lane-pads to 128 lanes)
    # Target ~12 MiB so the tile fits every chip's default scoped VMEM
    # (16 MiB v5e, 32 MiB v6e/v7x) with headroom.
    vmem_budget = 12 * 1024 * 1024
    per_row_bytes = 2 * dim * out_bytes + 2 * 128 * 4
    tb_budget = max(row_align, (vmem_budget // per_row_bytes) // row_align * row_align)
    if B > row_align:
        # Keep grid >= 2 so the "parallel" axis can shard across both
        # TensorCores on v7x (harmless on single-TC v5e/v6e).
        tb = min(tb_budget, _round_up(pl.cdiv(B, 2), row_align))
    else:
        tb = row_align
    grid = (pl.cdiv(B, tb),)

    time2d = time.astype(jnp.float32).reshape(B, 1)

    kernel = functools.partial(
        _sinusoidal_kernel, half_dim=half_dim, neg_scale=neg_scale
    )

    # No padding / trailing slice: Pallas masks the partial boundary block.
    return pl.pallas_call(
        kernel,
        out_shape=jax.ShapeDtypeStruct((B, dim), out_dtype),
        grid_spec=pltpu.PrefetchScalarGridSpec(
            num_scalar_prefetch=0,
            grid=grid,
            in_specs=[pl.BlockSpec((tb, 1), lambda i: (i, 0))],
            out_specs=pl.BlockSpec((tb, dim), lambda i: (i, 0)),
        ),
        compiler_params=pltpu.CompilerParams(
            dimension_semantics=("parallel",),
            vmem_limit_bytes=32 * 1024 * 1024,
        ),
    )(time2d)


def _reference(time, dim):
    half_dim = dim // 2
    emb = math.log(10000.0) / (half_dim - 1)
    emb = jnp.exp(jnp.arange(half_dim, dtype=jnp.float32) * -emb)
    emb = time[:, None].astype(jnp.float32) * emb[None, :]
    return jnp.concatenate([jnp.sin(emb), jnp.cos(emb)], axis=-1)


if __name__ == "__main__":
    key = jax.random.PRNGKey(0)

    # Case 1: module-typical small shape (B=8, dim=32); diffusion-style int timesteps.
    B1, dim1 = 8, 32
    t1 = jax.random.randint(key, (B1,), 0, 1000, dtype=jnp.int32)
    out1 = jax.block_until_ready(sinusoidal_position_embeddings(t1, dim=dim1))
    ref1 = _reference(t1, dim1)
    assert out1.shape == (B1, dim1)
    assert jnp.allclose(out1, ref1, atol=2e-3, rtol=2e-3), "mismatch vs reference (case 1)"

    # Case 2: ragged batch (not a multiple of 8) — exercises the masked partial block.
    B2, dim2 = 10, 64
    t2 = jax.random.uniform(
        jax.random.fold_in(key, 1), (B2,), jnp.float32, 0.0, 1000.0
    )
    out2 = jax.block_until_ready(sinusoidal_position_embeddings(t2, dim=dim2))
    ref2 = _reference(t2, dim2)
    assert out2.shape == (B2, dim2)
    assert jnp.allclose(out2, ref2, atol=2e-3, rtol=2e-3), "mismatch vs reference (case 2)"

    # Case 3: multi-step grid with a partial boundary block (grid = 2).
    B3, dim3 = 300, 128
    t3 = jax.random.uniform(
        jax.random.fold_in(key, 2), (B3,), jnp.float32, 0.0, 1000.0
    )
    out3 = jax.block_until_ready(sinusoidal_position_embeddings(t3, dim=dim3))
    ref3 = _reference(t3, dim3)
    assert out3.shape == (B3, dim3)
    assert jnp.allclose(out3, ref3, atol=2e-3, rtol=2e-3), "mismatch vs reference (case 3)"

    print("KERNEL_OK")
</pallas_src>

<mosaic_0001>
module attributes {stable_mosaic.version = 11 : i64} {
  func.func @_sinusoidal_kernel(%arg0: i32, %arg1: memref<8x1xf32, #tpu.memory_space<vmem>>, %arg2: memref<8x32xf32, #tpu.memory_space<vmem>>) attributes {dimension_semantics = [#tpu.dimension_semantics<parallel>], iteration_bounds = array<i64: 1>, scalar_prefetch = 0 : i64, scratch_operands = 0 : i64, tpu.core_type = #tpu.core_type<tc>, window_params = [{transform_indices = @transform_0, window_bounds = array<i64: 8, 1>}, {transform_indices = @transform_1, window_bounds = array<i64: 8, 32>}]} {
    %c0 = arith.constant 0 : index
    %c0_0 = arith.constant 0 : index
    %0 = vector.load %arg1[%c0, %c0_0] : memref<8x1xf32, #tpu.memory_space<vmem>>, vector<8x1xf32>
    %1 = tpu.iota {dimensions = array<i32: 1>} : vector<1x16xi32>
    %2 = arith.sitofp %1 : vector<1x16xi32> to vector<1x16xf32>
    %cst = arith.constant -0.614022672 : f32
    %3 = vector.broadcast %cst : f32 to vector<1x16xf32>
    %4 = arith.mulf %2, %3 : vector<1x16xf32>
    %5 = math.exp %4 : vector<1x16xf32>
    %6 = vector.broadcast %0 : vector<8x1xf32> to vector<8x16xf32>
    %7 = vector.broadcast %5 : vector<1x16xf32> to vector<8x16xf32>
    %8 = arith.mulf %6, %7 : vector<8x16xf32>
    %9 = math.sin %8 : vector<8x16xf32>
    %10 = math.cos %8 : vector<8x16xf32>
    %11 = tpu.concatenate %9, %10 in 1 : vector<8x16xf32>, vector<8x16xf32> -> vector<8x32xf32>
    %c0_1 = arith.constant 0 : index
    %c0_2 = arith.constant 0 : index
    %12 = vector.load %arg2[%c0_1, %c0_2] : memref<8x32xf32, #tpu.memory_space<vmem>>, vector<8x32xf32>
    tpu.vector_store %arg2[%c0_1, %c0_2], %11 {strides = array<i32>} : memref<8x32xf32, #tpu.memory_space<vmem>>, vector<8x32xf32>,
    return
  }
  func.func @transform_0(%arg0: i32) -> (i32, i32) {
    %c0_i32 = arith.constant 0 : i32
    %c0_i32_0 = arith.constant 0 : i32
    return %arg0, %c0_i32 : i32, i32
  }
  func.func @transform_1(%arg0: i32) -> (i32, i32) {
    %c0_i32 = arith.constant 0 : i32
    %c0_i32_0 = arith.constant 0 : i32
    return %arg0, %c0_i32 : i32, i32
  }
}

</mosaic_0001>

<llo_original>
// kernel: sinusoidal_position_embeddings.1
$region0: #{sinusoidal_position_embeddings.1}
  #allocation0 [shape = 'u32[]', space=smem, size = 0x4, offset = 0x4, fixed_abs, tag = 'smem constant byte address 0x4 - core index']
  #allocation1 [shape = 'u32[72,128]{1,0:T(1,128)}', space=vmem, size = 0x9000, scoped, tag = 'internal scratch']
  %s0 = inlined_call_operand.vmem [shape: f32[8,1], index: 0, kind: input, shape index: {}]
  %s1 = inlined_call_operand.hbm [shape: f32[8,32], index: 1, kind: output, shape index: {}]
  %s2 = sld [smem:[#allocation0]]
  $region14: #{sinusoidal_position_embeddings.1} parent=0
    _
  %s4 = ssub.s32 1, %s2
  %s5 = scalar_select 0, %s4, %s2
  $region1: #{sinusoidal_position_embeddings.1} parent=0
    #allocation2 [shape = 'u8[4096]{0}', space=vmem, size = 0x1000, scoped, tag = 'output window, operand 0, single buffered']
    #allocation3 [shape = 's32[1]{0}', space=sflag, size = 0x4, scoped, tag = 'scoped memory for sinusoidal_position_embeddings.1']
    %6 = vsyncpa [#allocation3], 0
    // Predicated region
    $region2: #{sinusoidal_position_embeddings.1} parent=1 // pred_check
      _
    $region3: #{sinusoidal_position_embeddings.1} parent=1 // pred_check_branch
      %8 = sbr.rel (0) target = $region5
    $region4: #{sinusoidal_position_embeddings.1} parent=1 // pred_region
      _
    $region5: #{sinusoidal_position_embeddings.1} parent=1 // pred_fallthru
      _
    %v9 = vld [vmem:[%s0] sm:$0xff]
    %v10 = vlaneseq
    %v11 = vand.u32 %v10, 127
    %v12 = vcvt.s32.f32 %v11
    %v13 = vmul.f32 %v12, -0.6140227
    %v14 = vmul.f32 %v13, 1.442695
    %v15 = vpow.pop %v14
    %17 = vset.pattern.permute.xlu0 0
    %18 = vperm.xlu0 %17, %v9
    %v19 = vpop.permute.xlu0 %18
    %v21 = vmul.f32 %v19, %v15
    %v22 = vand.u32 2147483647, %v21
    %vm23 = vcmp.le.f32.partialorder %v22, 0.7853982
    %vm24 = vcmp.lt.s32.totalorder %v21, 0
    %v25 = vand.u32 %v21, 2139095040
    %v26 = vshrl.u32 %v25, 23
    %v27 = vsub.s32 %v26, 127
    %v28 = vand.u32 2147483647, %v21
    %v29 = vand.u32 %v28, 8388607
    %v30 = vor.u32 %v29, 8388608
    %v31 = vsub.s32 0, %v30
    %v32 = vadd.s32 %v27, 1
    %vm33 = vcmp.gt.s32.totalorder %v32, 0
    %v34 = vsel %vm33, %v32, 0
    %v35 = vshrl.u32 %v34, 5
    %v36 = vand.u32 %v34, 31
    %v37 = vsub.s32 32, %v36
    %v38 = vshrl.u32 683565275, %v37
    %v39 = vshll.u32 683565275, %v36
    %v40 = vshrl.u32 2475754826, %v37
    %v41 = vor.u32 %v39, %v40
    %v42 = vshll.u32 2475754826, %v36
    %v43 = vshrl.u32 2131351028, %v37
    %v44 = vor.u32 %v42, %v43
    %v45 = vshll.u32 2131351028, %v36
    %v46 = vshrl.u32 2102212464, %v37
    %v47 = vor.u32 %v45, %v46
    %v48 = vshll.u32 2102212464, %v36
    %v49 = vshrl.u32 920167782, %v37
    %v50 = vor.u32 %v48, %v49
    %v51 = vshll.u32 920167782, %v36
    %v52 = vshrl.u32 1326507024, %v37
    %v53 = vor.u32 %v51, %v52
    %vm54 = vcmp.lt.s32.totalorder %v35, 1
    %vm55 = vcmp.lt.s32.totalorder %v35, 2
    %vm56 = vcmp.lt.s32.totalorder %v35, 3
    %vm57 = vcmp.lt.s32.totalorder %v35, 4
    %v58 = vsel %vm54, %v38, %v41
    %v59 = vsel %vm57, %v47, 2102212464
    %v60 = vsel %vm56, %v44, %v59
    %v61 = vsel %vm55, %v58, %v60
    %v62 = vsel %vm54, %v41, %v44
    %v63 = vsel %vm57, %v50, 920167782
    %v64 = vsel %vm56, %v47, %v63
    %v65 = vsel %vm55, %v62, %v64
    %v66 = vsel %vm54, %v44, %v47
    %v67 = vsel %vm57, %v53, 1326507024
    %v68 = vsel %vm56, %v50, %v67
    %v69 = vsel %vm55, %v66, %v68
    %v70 = vshll.u32 %v30, 8
    %v71 = vand.u32 %v70, 65535
    %v72 = vshrl.u32 %v70, 16
    %v73 = vand.u32 %v69, 65535
    %v74 = vshrl.u32 %v69, 16
    %v75 = vmul.u32 %v71, %v73
    %v76 = vmul.u32 %v71, %v74
    %v77 = vmul.u32 %v72, %v73
    %v78 = vmul.u32 %v72, %v74
    %v79 = vshll.u32 %v76, 16
    %v80 = vshrl.u32 %v76, 16
    %v81 = vshll.u32 %v77, 16
    %v82 = vshrl.u32 %v77, 16
    %vm83 = vc.u32 %v75, %v79
    %v84 = vsel %vm83, 1, 0
    %v85 = vadd.s32 %v75, %v79
    %v86 = vadd.s32 %v78, %v84
    %vm87 = vc.u32 %v85, %v81
    %v88 = vsel %vm87, 1, 0
    %v89 = vadd.s32 %v85, %v81
    %v90 = vadd.s32 %v86, %v88
    %v91 = vadd.s32 %v90, %v80
    %v92 = vadd.s32 %v91, %v82
    %v93 = vand.u32 %v70, 65535
    %v94 = vshrl.u32 %v70, 16
    %v95 = vand.u32 %v65, 65535
    %v96 = vshrl.u32 %v65, 16
    %v97 = vmul.u32 %v93, %v95
    %v98 = vmul.u32 %v93, %v96
    %v99 = vmul.u32 %v94, %v95
    %v100 = vmul.u32 %v94, %v96
    %v101 = vshll.u32 %v98, 16
    %v102 = vshrl.u32 %v98, 16
    %v103 = vshll.u32 %v99, 16
    %v104 = vshrl.u32 %v99, 16
    %vm105 = vc.u32 %v97, %v101
    %v106 = vsel %vm105, 1, 0
    %v107 = vadd.s32 %v97, %v101
    %v108 = vadd.s32 %v100, %v106
    %vm109 = vc.u32 %v107, %v103
    %v110 = vsel %vm109, 1, 0
    %v111 = vadd.s32 %v107, %v103
    %v112 = vadd.s32 %v108, %v110
    %v113 = vadd.s32 %v112, %v102
    %v114 = vadd.s32 %v113, %v104
    %v115 = vmul.u32 %v70, %v61
    %v116 = vadd.s32 %v92, %v111
    %vm117 = vc.u32 %v92, %v111
    %v118 = vadd.s32 %v114, 1
    %v119 = vsel %vm117, %v118, %v114
    %v120 = vadd.s32 %v115, %v119
    %v121 = vadd.s32 %v120, 536870912
    %v122 = vshrl.u32 %v121, 30
    %v123 = vshll.u32 %v122, 30
    %v124 = vsub.s32 %v120, %v123
    %vm125 = vcmp.lt.s32.totalorder %v124, 0
    %v126 = vsub.s32 0, %v124
    %v127 = vsel %vm125, %v126, %v124
    %v128 = vclz %v127
    %v129 = vsub.s32 %v128, 2
    %vm130 = vcmp.gt.s32.totalorder 0, %v129
    %v131 = vsel %vm130, 0, %v129
    %v132 = vsub.s32 32, %v131
    %v133 = vshll.u32 %v124, %v131
    %v134 = vshrl.u32 %v116, %v132
    %v135 = vor.u32 %v133, %v134
    %v136 = vsub.s32 4294967266, %v131
    %v137 = vadd.s32 %v136, 127
    %v138 = vshll.u32 %v137, 23
    %v139 = vor.u32 4788187, %v138
    %v140 = vand.u32 2147483647, %v139
    %v142 = vcvt.s32.f32 %v135
    %v143 = vmul.f32 %v142, %v140
    %v144 = vxor.u32 %v143, 2147483648
    %v145 = vsel %vm24, %v144, %v143
    %v146 = vsub.s32 4, %v122
    %v147 = vsel %vm24, %v146, %v122
    %v148 = vsel %vm23, %v21, %v145
    %v149 = vsel %vm23, 0, %v147
    %v150 = vmul.f32 %v148, %v148
    %v151 = vmul.f32 %v150, -0.001358992
    %v152 = vadd.f32 %v151, 0.041655596
    %v153 = vmul.f32 %v150, %v152
    %v154 = vadd.f32 %v153, -0.4999988
    %v155 = vmul.f32 %v150, %v154
    %v156 = vadd.f32 1.0, %v155
    %v157 = vmul.f32 %v148, %v148
    %v158 = vmul.f32 %v157, -0.00019511016
    %v159 = vadd.f32 %v158, 0.008332121
    %v160 = vmul.f32 %v157, %v159
    %v161 = vadd.f32 %v160, -0.16666654
    %v162 = vmul.f32 %v157, %v161
    %v163 = vadd.f32 %v162, 1.0
    %v164 = vmul.f32 %v163, %v148
    %vm165 = vweird.f32 %v21
    %v166 = vadd.s32 %v149, 3
    %v167 = vand.u32 %v166, 3
    %vm168 = vcmp.lt.s32.totalorder %v167, 2
    %vm169 = vcmp.eq.s32.totalorder %v167, 0
    %v170 = vxor.u32 %v164, 2147483648
    %v171 = vsel %vm169, %v156, %v170
    %vm172 = vcmp.eq.s32.totalorder %v167, 2
    %v173 = vxor.u32 %v156, 2147483648
    %v174 = vsel %vm172, %v173, %v164
    %v175 = vsel %vm168, %v171, %v174
    %v176 = vsel %vm165, nan, %v175
    %v177 = vand.u32 2147483647, %v21
    %vm178 = vcmp.le.f32.partialorder %v177, 0.7853982
    %vm179 = vcmp.lt.s32.totalorder %v21, 0
    %v180 = vand.u32 %v21, 2139095040
    %v181 = vshrl.u32 %v180, 23
    %v182 = vsub.s32 %v181, 127
    %v183 = vand.u32 2147483647, %v21
    %v184 = vand.u32 %v183, 8388607
    %v185 = vor.u32 %v184, 8388608
    %v186 = vsub.s32 0, %v185
    %v187 = vadd.s32 %v182, 1
    %vm188 = vcmp.gt.s32.totalorder %v187, 0
    %v189 = vsel %vm188, %v187, 0
    %v190 = vshrl.u32 %v189, 5
    %v191 = vand.u32 %v189, 31
    %v192 = vsub.s32 32, %v191
    %v193 = vshrl.u32 683565275, %v192
    %v194 = vshll.u32 683565275, %v191
    %v195 = vshrl.u32 2475754826, %v192
    %v196 = vor.u32 %v194, %v195
    %v197 = vshll.u32 2475754826, %v191
    %v198 = vshrl.u32 2131351028, %v192
    %v199 = vor.u32 %v197, %v198
    %v200 = vshll.u32 2131351028, %v191
    %v201 = vshrl.u32 2102212464, %v192
    %v202 = vor.u32 %v200, %v201
    %v203 = vshll.u32 2102212464, %v191
    %v204 = vshrl.u32 920167782, %v192
    %v205 = vor.u32 %v203, %v204
    %v206 = vshll.u32 920167782, %v191
    %v207 = vshrl.u32 1326507024, %v192
    %v208 = vor.u32 %v206, %v207
    %vm209 = vcmp.lt.s32.totalorder %v190, 1
    %vm210 = vcmp.lt.s32.totalorder %v190, 2
    %vm211 = vcmp.lt.s32.totalorder %v190, 3
    %vm212 = vcmp.lt.s32.totalorder %v190, 4
    %v213 = vsel %vm209, %v193, %v196
    %v214 = vsel %vm212, %v202, 2102212464
    %v215 = vsel %vm211, %v199, %v214
    %v216 = vsel %vm210, %v213, %v215
    %v217 = vsel %vm209, %v196, %v199
    %v218 = vsel %vm212, %v205, 920167782
    %v219 = vsel %vm211, %v202, %v218
    %v220 = vsel %vm210, %v217, %v219
    %v221 = vsel %vm209, %v199, %v202
    %v222 = vsel %vm212, %v208, 1326507024
    %v223 = vsel %vm211, %v205, %v222
    %v224 = vsel %vm210, %v221, %v223
    %v225 = vshll.u32 %v185, 8
    %v226 = vand.u32 %v225, 65535
    %v227 = vshrl.u32 %v225, 16
    %v228 = vand.u32 %v224, 65535
    %v229 = vshrl.u32 %v224, 16
    %v230 = vmul.u32 %v226, %v228
    %v231 = vmul.u32 %v226, %v229
    %v232 = vmul.u32 %v227, %v228
    %v233 = vmul.u32 %v227, %v229
    %v234 = vshll.u32 %v231, 16
    %v235 = vshrl.u32 %v231, 16
    %v236 = vshll.u32 %v232, 16
    %v237 = vshrl.u32 %v232, 16
    %vm238 = vc.u32 %v230, %v234
    %v239 = vsel %vm238, 1, 0
    %v240 = vadd.s32 %v230, %v234
    %v241 = vadd.s32 %v233, %v239
    %vm242 = vc.u32 %v240, %v236
    %v243 = vsel %vm242, 1, 0
    %v244 = vadd.s32 %v240, %v236
    %v245 = vadd.s32 %v241, %v243
    %v246 = vadd.s32 %v245, %v235
    %v247 = vadd.s32 %v246, %v237
    %v248 = vand.u32 %v225, 65535
    %v249 = vshrl.u32 %v225, 16
    %v250 = vand.u32 %v220, 65535
    %v251 = vshrl.u32 %v220, 16
    %v252 = vmul.u32 %v248, %v250
    %v253 = vmul.u32 %v248, %v251
    %v254 = vmul.u32 %v249, %v250
    %v255 = vmul.u32 %v249, %v251
    %v256 = vshll.u32 %v253, 16
    %v257 = vshrl.u32 %v253, 16
    %v258 = vshll.u32 %v254, 16
    %v259 = vshrl.u32 %v254, 16
    %vm260 = vc.u32 %v252, %v256
    %v261 = vsel %vm260, 1, 0
    %v262 = vadd.s32 %v252, %v256
    %v263 = vadd.s32 %v255, %v261
    %vm264 = vc.u32 %v262, %v258
    %v265 = vsel %vm264, 1, 0
    %v266 = vadd.s32 %v262, %v258
    %v267 = vadd.s32 %v263, %v265
    %v268 = vadd.s32 %v267, %v257
    %v269 = vadd.s32 %v268, %v259
    %v270 = vmul.u32 %v225, %v216
    %v271 = vadd.s32 %v247, %v266
    %vm272 = vc.u32 %v247, %v266
    %v273 = vadd.s32 %v269, 1
    %v274 = vsel %vm272, %v273, %v269
    %v275 = vadd.s32 %v270, %v274
    %v276 = vadd.s32 %v275, 536870912
    %v277 = vshrl.u32 %v276, 30
    %v278 = vshll.u32 %v277, 30
    %v279 = vsub.s32 %v275, %v278
    %vm280 = vcmp.lt.s32.totalorder %v279, 0
    %v281 = vsub.s32 0, %v279
    %v282 = vsel %vm280, %v281, %v279
    %v283 = vclz %v282
    %v284 = vsub.s32 %v283, 2
    %vm285 = vcmp.gt.s32.totalorder 0, %v284
    %v286 = vsel %vm285, 0, %v284
    %v287 = vsub.s32 32, %v286
    %v288 = vshll.u32 %v279, %v286
    %v289 = vshrl.u32 %v271, %v287
    %v290 = vor.u32 %v288, %v289
    %v291 = vsub.s32 4294967266, %v286
    %v292 = vadd.s32 %v291, 127
    %v293 = vshll.u32 %v292, 23
    %v294 = vor.u32 4788187, %v293
    %v295 = vand.u32 2147483647, %v294
    %v297 = vcvt.s32.f32 %v290
    %v298 = vmul.f32 %v297, %v295
    %v299 = vxor.u32 %v298, 2147483648
    %v300 = vsel %vm179, %v299, %v298
    %v301 = vsub.s32 4, %v277
    %v302 = vsel %vm179, %v301, %v277
    %v303 = vsel %vm178, %v21, %v300
    %v304 = vsel %vm178, 0, %v302
    %v305 = vmul.f32 %v303, %v303
    %v306 = vmul.f32 %v305, -0.001358992
    %v307 = vadd.f32 %v306, 0.041655596
    %v308 = vmul.f32 %v305, %v307
    %v309 = vadd.f32 %v308, -0.4999988
    %v310 = vmul.f32 %v305, %v309
    %v311 = vadd.f32 1.0, %v310
    %v312 = vmul.f32 %v303, %v303
    %v313 = vmul.f32 %v312, -0.00019511016
    %v314 = vadd.f32 %v313, 0.008332121
    %v315 = vmul.f32 %v312, %v314
    %v316 = vadd.f32 %v315, -0.16666654
    %v317 = vmul.f32 %v312, %v316
    %v318 = vadd.f32 %v317, 1.0
    %v319 = vmul.f32 %v318, %v303
    %vm320 = vweird.f32 %v21
    %v321 = vand.u32 %v304, 3
    %vm322 = vcmp.lt.s32.totalorder %v321, 2
    %vm323 = vcmp.eq.s32.totalorder %v321, 0
    %v324 = vxor.u32 %v319, 2147483648
    %v325 = vsel %vm323, %v311, %v324
    %vm326 = vcmp.eq.s32.totalorder %v321, 2
    %v327 = vxor.u32 %v311, 2147483648
    %v328 = vsel %vm326, %v327, %v319
    %v329 = vsel %vm322, %v325, %v328
    %v330 = vsel %vm320, nan, %v329
    %332 = vrot.lane.b32.xlu0 %v330, 16
    %v333 = vpop.permute.xlu0 %332
    %vm335 = vcmask 130048
    %v336 = vsel %vm335, %v176, %v333
    %vm337 = vcmask 261120
    %338 = vst.msk [vmem:[#allocation2] sm:$0xff] %vm337, %v336
    // Predicated region
    $region6: #{sinusoidal_position_embeddings.1} parent=1 // pred_check
      _
    $region7: #{sinusoidal_position_embeddings.1} parent=1 // pred_check_branch
      %340 = sbr.rel (0) target = $region9
    $region8: #{sinusoidal_position_embeddings.1} parent=1 // pred_region
      %342 = vsyncadd [#allocation3], 0
      %s344 = sshll.u32 [#allocation2], 4
      %s345 = int_to_ptr.vmem [resolvable:$true] %s344
      %s346 = sshll.u32 %s1, 4
      %s347 = int_to_ptr.hbm [resolvable:$true] %s346
      %349 = dma.vmem_to_hbm [thread:$0]  %s345, 128, %s347, [#allocation3]
    $region9: #{sinusoidal_position_embeddings.1} parent=1 // pred_fallthru
      _
    // Predicated region
    $region10: #{sinusoidal_position_embeddings.1} parent=1 // pred_check
      _
    $region11: #{sinusoidal_position_embeddings.1} parent=1 // pred_check_branch
      %351 = sbr.rel (0) target = $region13
    $region12: #{sinusoidal_position_embeddings.1} parent=1 // pred_region
      %353 = dma.done [#allocation3], 128
    $region13: #{sinusoidal_position_embeddings.1} parent=1 // pred_fallthru
      _
    %354 = vsyncpa [#allocation3], 1

</llo_original>
